<compile_context>
chip_gen: v6e
topology: v6e:2x2x1
jax: 0.10.0
libtpu: 0.0.40
codegen_flags: <defaults>
</compile_context>

<pallas_src>
import jax
import jax.numpy as jnp
from jax.experimental import pallas as pl
from jax.experimental.pallas import tpu as pltpu

EPS = 1e-5
LANE = 128      # lane width: last-dim padding target for lane-dense stores
SUBLANE = 8     # minimum sublane granularity for the batch dim
MIB = 1024 * 1024


def _round_up(n, m):
    return ((n + m - 1) // m) * m


def _vmem_capacity_bytes():
    """Physical VMEM of the local TPU; fall back to v7x's 64 MiB (smallest)."""
    try:
        cap = int(pltpu.get_tpu_info().vmem_capacity_bytes)
        if cap > 0:
            return cap
    except Exception:
        pass
    return 64 * MIB


def _spec(shape, index_map, buffers=None):
    """BlockSpec with optional explicit pipeline buffer depth."""
    if buffers is not None:
        try:
            return pl.BlockSpec(shape, index_map,
                                pipeline_mode=pl.Buffered(buffers))
        except Exception:
            pass
    return pl.BlockSpec(shape, index_map)


# ---------------------------------------------------------------------------
# Kernel A (resident weights): one batch tile per grid step.
# ---------------------------------------------------------------------------
def _resblock_kernel_resident(x_ref, w1_ref, b1_ref, w2_ref, b2_ref, o_ref):
    x = x_ref[...]                                              # (TB, Dp) f32

    # fc1 (+ folded BN1) on the MXU in bf16 with f32 accumulation, then ReLU.
    h = jnp.dot(x.astype(jnp.bfloat16), w1_ref[...],
                preferred_element_type=jnp.float32) + b1_ref[...]
    h = jnp.maximum(h, 0.0)

    # TODO(synk): dropout is the identity here (PyTorch eval-mode semantics).

    # fc2 (+ folded BN2), residual add in f32, final ReLU.
    y = jnp.dot(h.astype(jnp.bfloat16), w2_ref[...],
                preferred_element_type=jnp.float32) + b2_ref[...]
    o_ref[...] = jnp.maximum(y + x, 0.0).astype(o_ref.dtype)


# ---------------------------------------------------------------------------
# Kernel B (hidden-dim tiled fallback): grid = (batch tiles, hidden tiles).
# ReLU is elementwise per hidden unit, so per-H-tile ReLU + accumulate is exact.
# ---------------------------------------------------------------------------
def _resblock_kernel_htiled(x_ref, w1_ref, b1_ref, w2_ref, b2_ref, o_ref,
                            acc_ref):
    hj = pl.program_id(1)

    @pl.when(hj == 0)
    def _():
        acc_ref[...] = jnp.zeros_like(acc_ref)

    x = x_ref[...]                                              # (TB, Dp) f32
    h = jnp.dot(x.astype(jnp.bfloat16), w1_ref[...],
                preferred_element_type=jnp.float32) + b1_ref[...]
    h = jnp.maximum(h, 0.0)
    acc_ref[...] += jnp.dot(h.astype(jnp.bfloat16), w2_ref[...],
                            preferred_element_type=jnp.float32)

    @pl.when(hj == pl.num_programs(1) - 1)
    def _():
        y = acc_ref[...] + b2_ref[...] + x
        o_ref[...] = jnp.maximum(y, 0.0).astype(o_ref.dtype)


# ---------------------------------------------------------------------------
# Wrapper: BN folding, padding, generation-aware tiling, pallas_call.
# ---------------------------------------------------------------------------
def _fold_bn_into_linear(w, b, gamma, beta, mean, var, eps=EPS):
    """Fold eval-mode BatchNorm1d into the preceding Linear (w is (in, out))."""
    scale = gamma * jax.lax.rsqrt(var + eps)                    # (1, out)
    w_f = w * scale                                             # broadcast over in
    b_f = (b - mean) * scale + beta                             # (1, out)
    return w_f, b_f


def residual_block(x, params):
    """x: (B, D) float32. params: dict of raw module params (see init_params)."""
    B, D = x.shape
    H = params["w1"].shape[1]

    # ---- fold BN (running stats) into fc weights / biases (in f32) ----------
    w1f, b1f = _fold_bn_into_linear(params["w1"], params["b1"], params["g1"],
                                    params["be1"], params["m1"], params["v1"])
    w2f, b2f = _fold_bn_into_linear(params["w2"], params["b2"], params["g2"],
                                    params["be2"], params["m2"], params["v2"])

    # ---- pad feature dims to multiples of 128 (lane-dense loads/stores) -----
    Dp, Hp = _round_up(D, LANE), _round_up(H, LANE)
    w1p = jnp.pad(w1f, ((0, Dp - D), (0, Hp - H))).astype(jnp.bfloat16)
    w2p = jnp.pad(w2f, ((0, Hp - H), (0, Dp - D))).astype(jnp.bfloat16)
    b1p = jnp.pad(b1f, ((0, 0), (0, Hp - H)))
    b2p = jnp.pad(b2f, ((0, 0), (0, Dp - D)))

    # ---- generation-aware VMEM budget ---------------------------------------
    capacity = _vmem_capacity_bytes()
    budget = int(0.75 * capacity)        # ~48 MiB on v7x, ~96 MiB on v5e/v6e
    headroom = 2 * MIB

    # Resident (single-buffered) weight/bias footprint.
    weight_bytes = 2 * Dp * Hp * 2 + (Hp + Dp) * 4

    # Per-batch-row VMEM: double-buffered x in + out tiles, plus the live
    # in-kernel intermediates (bf16 x, f32 h, bf16 h, f32 y).
    per_row_io = (2 + 2) * Dp * 4
    per_row_tmp = Dp * 2 + Hp * 4 + Hp * 2 + Dp * 4
    per_row = per_row_io + per_row_tmp

    use_resident = weight_bytes + 16 * per_row + headroom <= budget

    def _batch_tile(initial):
        """Clamp to the batch, keep 16-multiples when tiling, ensure >=2 steps
        on v7x when the batch allows it."""
        tile_b = initial
        if tile_b >= B:
            tile_b = _round_up(B, SUBLANE)          # whole batch in one tile
        else:
            tile_b = max(16, (tile_b // 16) * 16)   # bf16 sublane pairs
        bp = _round_up(B, tile_b)
        while bp // tile_b < 2 and tile_b > 2 * SUBLANE:
            tile_b = _round_up(tile_b // 2, SUBLANE)
            bp = _round_up(B, tile_b)
        return tile_b, bp

    # =========================================================================
    # Path A: weights resident in VMEM across all grid steps.
    # =========================================================================
    if use_resident:
        avail = budget - weight_bytes - headroom
        max_tile = max(16, (avail // per_row) // 16 * 16)
        tile_b, Bp = _batch_tile(min(1024, max_tile))

        xp = jnp.pad(x, ((0, Bp - B), (0, Dp - D)))
        grid = (Bp // tile_b,)

        footprint = (4 * tile_b * Dp * 4            # 2-buf x + 2-buf out tiles
                     + tile_b * per_row_tmp         # live intermediates
                     + weight_bytes)                # single-buffered residents
        vmem_limit = int(min(capacity, max(16 * MIB, footprint + headroom)))

        cost = pl.CostEstimate(
            flops=2 * Bp * (Dp * Hp + Hp * Dp),
            transcendentals=0,
            bytes_accessed=2 * Bp * Dp * 4 + weight_bytes,
        )

        out = pl.pallas_call(
            _resblock_kernel_resident,
            out_shape=jax.ShapeDtypeStruct((Bp, Dp), x.dtype),
            grid_spec=pltpu.PrefetchScalarGridSpec(
                num_scalar_prefetch=0,
                grid=grid,
                in_specs=[
                    _spec((tile_b, Dp), lambda i: (i, 0)),          # x tile
                    _spec((Dp, Hp), lambda i: (0, 0), buffers=1),   # w1 resident
                    _spec((1, Hp), lambda i: (0, 0), buffers=1),    # b1 resident
                    _spec((Hp, Dp), lambda i: (0, 0), buffers=1),   # w2 resident
                    _spec((1, Dp), lambda i: (0, 0), buffers=1),    # b2 resident
                ],
                out_specs=pl.BlockSpec((tile_b, Dp), lambda i: (i, 0)),
            ),
            compiler_params=pltpu.CompilerParams(
                dimension_semantics=("parallel",),
                vmem_limit_bytes=vmem_limit,
            ),
            cost_estimate=cost,
        )(xp, w1p, b1p, w2p, b2p)

        return out[:B, :D]

    # =========================================================================
    # Path B: weights too large to hold resident -> tile the hidden dim on an
    # "arbitrary" reduction axis with a VMEM accumulator.
    # TODO(synk): if Dp itself is too large for VMEM this path would also need
    #             an output-feature tiling axis; not implemented.
    # =========================================================================
    tile_b, Bp = _batch_tile(256)
    xp = jnp.pad(x, ((0, Bp - B), (0, Dp - D)))

    # Bytes that do not scale with the hidden tile.
    fixed = (4 * tile_b * Dp * 4                    # 2-buf x + 2-buf out tiles
             + tile_b * Dp * 4                      # acc scratch
             + tile_b * Dp * (2 + 4)                # bf16 x + f32 partial
             + 2 * Dp * 4                           # b2 (single-buffered-ish)
             + headroom)
    # Bytes per 128 hidden columns: double-buffered w1/w2/b1 slabs + h temps.
    per_hchunk = 128 * (8 * Dp + 8 + 6 * tile_b)
    n_chunks = max(1, (budget - fixed) // per_hchunk) if budget > fixed else 1
    tile_h = int(min(Hp, 128 * n_chunks))
    Hpp = _round_up(Hp, tile_h)

    w1pp = jnp.pad(w1p, ((0, 0), (0, Hpp - Hp)))
    w2pp = jnp.pad(w2p, ((0, Hpp - Hp), (0, 0)))
    b1pp = jnp.pad(b1p, ((0, 0), (0, Hpp - Hp)))

    grid = (Bp // tile_b, Hpp // tile_h)
    footprint = fixed + per_hchunk * (tile_h // 128)
    vmem_limit = int(min(capacity, max(16 * MIB, footprint + headroom)))

    cost = pl.CostEstimate(
        flops=2 * Bp * (Dp * Hpp + Hpp * Dp),
        transcendentals=0,
        bytes_accessed=(2 * Bp * Dp * 4
                        + (Bp // tile_b) * (2 * Dp * Hpp * 2 + Hpp * 4)
                        + Dp * 4),
    )

    out = pl.pallas_call(
        _resblock_kernel_htiled,
        out_shape=jax.ShapeDtypeStruct((Bp, Dp), x.dtype),
        grid_spec=pltpu.PrefetchScalarGridSpec(
            num_scalar_prefetch=0,
            grid=grid,
            in_specs=[
                _spec((tile_b, Dp), lambda i, j: (i, 0)),           # x tile
                _spec((Dp, tile_h), lambda i, j: (0, j)),           # w1 slab
                _spec((1, tile_h), lambda i, j: (0, j)),            # b1 slab
                _spec((tile_h, Dp), lambda i, j: (j, 0)),           # w2 slab
                _spec((1, Dp), lambda i, j: (0, 0), buffers=1),     # b2
            ],
            out_specs=pl.BlockSpec((tile_b, Dp), lambda i, j: (i, 0)),
            scratch_shapes=[pltpu.VMEM((tile_b, Dp), jnp.float32)],
        ),
        compiler_params=pltpu.CompilerParams(
            dimension_semantics=("parallel", "arbitrary"),
            vmem_limit_bytes=vmem_limit,
        ),
        cost_estimate=cost,
    )(xp, w1pp, b1pp, w2pp, b2p)

    return out[:B, :D]


# ---------------------------------------------------------------------------
# Deterministic synthetic parameters (shapes match the PyTorch module).
# ---------------------------------------------------------------------------
def init_params(key, input_dim, hidden_dim):
    ks = jax.random.split(key, 12)
    # PyTorch Linear stores (out, in); we keep (in, out) so the kernel does x @ W.
    w1 = jax.random.normal(ks[0], (input_dim, hidden_dim), jnp.float32) * 0.05
    b1 = jax.random.normal(ks[1], (1, hidden_dim), jnp.float32) * 0.01
    w2 = jax.random.normal(ks[2], (hidden_dim, input_dim), jnp.float32) * 0.05
    b2 = jax.random.normal(ks[3], (1, input_dim), jnp.float32) * 0.01
    # BatchNorm1d affine params + running stats (as if trained; deterministic).
    g1 = 1.0 + 0.1 * jax.random.normal(ks[4], (1, hidden_dim), jnp.float32)
    be1 = 0.1 * jax.random.normal(ks[5], (1, hidden_dim), jnp.float32)
    m1 = 0.05 * jax.random.normal(ks[6], (1, hidden_dim), jnp.float32)
    v1 = 1.0 + 0.1 * jnp.abs(jax.random.normal(ks[7], (1, hidden_dim), jnp.float32))
    g2 = 1.0 + 0.1 * jax.random.normal(ks[8], (1, input_dim), jnp.float32)
    be2 = 0.1 * jax.random.normal(ks[9], (1, input_dim), jnp.float32)
    m2 = 0.05 * jax.random.normal(ks[10], (1, input_dim), jnp.float32)
    v2 = 1.0 + 0.1 * jnp.abs(jax.random.normal(ks[11], (1, input_dim), jnp.float32))
    return dict(w1=w1, b1=b1, g1=g1, be1=be1, m1=m1, v1=v1,
                w2=w2, b2=b2, g2=g2, be2=be2, m2=m2, v2=v2)


def _reference(x, p):
    """Pure-f32 eval-mode reference (unfolded BN)."""
    h = x @ p["w1"] + p["b1"]
    h = (h - p["m1"]) * jax.lax.rsqrt(p["v1"] + EPS) * p["g1"] + p["be1"]
    h = jnp.maximum(h, 0.0)
    y = h @ p["w2"] + p["b2"]
    y = (y - p["m2"]) * jax.lax.rsqrt(p["v2"] + EPS) * p["g2"] + p["be2"]
    return jnp.maximum(y + x, 0.0)


if __name__ == "__main__":
    key = jax.random.PRNGKey(0)
    kx, kp = jax.random.split(key)

    batch, input_dim, hidden_dim = 8, 32, 64
    x = jax.random.normal(kx, (batch, input_dim), jnp.float32)
    params = init_params(kp, input_dim, hidden_dim)

    out = residual_block(x, params)
    out = jax.block_until_ready(out)

    ref = _reference(x, params)
    assert out.shape == (batch, input_dim)
    # bf16 weights (f32 accumulation) -> small deviation from the f32 reference.
    assert jnp.allclose(out, ref, atol=1e-2, rtol=1e-2), (
        float(jnp.max(jnp.abs(out - ref))))

    print("KERNEL_OK")
</pallas_src>

<mosaic_0001>
module attributes {stable_mosaic.version = 11 : i64} {
  func.func @_resblock_kernel_resident(%arg0: i32, %arg1: memref<8x128xf32, #tpu.memory_space<vmem>>, %arg2: memref<128x128xbf16, #tpu.memory_space<vmem>>, %arg3: memref<1x128xf32, #tpu.memory_space<vmem>>, %arg4: memref<128x128xbf16, #tpu.memory_space<vmem>>, %arg5: memref<1x128xf32, #tpu.memory_space<vmem>>, %arg6: memref<8x128xf32, #tpu.memory_space<vmem>>) attributes {dimension_semantics = [#tpu.dimension_semantics<parallel>], iteration_bounds = array<i64: 1>, scalar_prefetch = 0 : i64, scratch_operands = 0 : i64, tpu.core_type = #tpu.core_type<tc>, window_params = [{transform_indices = @transform_0, window_bounds = array<i64: 8, 128>}, {pipeline_mode = #tpu.pipeline_mode<synchronous>, transform_indices = @transform_1, window_bounds = array<i64: 128, 128>}, {pipeline_mode = #tpu.pipeline_mode<synchronous>, transform_indices = @transform_2, window_bounds = array<i64: 1, 128>}, {pipeline_mode = #tpu.pipeline_mode<synchronous>, transform_indices = @transform_3, window_bounds = array<i64: 128, 128>}, {pipeline_mode = #tpu.pipeline_mode<synchronous>, transform_indices = @transform_4, window_bounds = array<i64: 1, 128>}, {transform_indices = @transform_5, window_bounds = array<i64: 8, 128>}]} {
    %c0 = arith.constant 0 : index
    %c0_0 = arith.constant 0 : index
    %0 = vector.load %arg1[%c0, %c0_0] : memref<8x128xf32, #tpu.memory_space<vmem>>, vector<8x128xf32>
    %1 = arith.truncf %0 : vector<8x128xf32> to vector<8x128xbf16>
    %c0_1 = arith.constant 0 : index
    %c0_2 = arith.constant 0 : index
    %2 = vector.load %arg2[%c0_1, %c0_2] : memref<128x128xbf16, #tpu.memory_space<vmem>>, vector<128x128xbf16>
    %cst = arith.constant dense<0.000000e+00> : vector<8x128xf32>
    %3 = tpu.matmul %1, %2, %cst {dimension_numbers = #tpu.dot_dimension_numbers<[1], [0], [0], [1], [0, 0, 1, 1], [], []>} : vector<8x128xbf16>, vector<128x128xbf16>, vector<8x128xf32> -> vector<8x128xf32>
    %c0_3 = arith.constant 0 : index
    %c0_4 = arith.constant 0 : index
    %4 = vector.load %arg3[%c0_3, %c0_4] : memref<1x128xf32, #tpu.memory_space<vmem>>, vector<1x128xf32>
    %5 = vector.broadcast %4 : vector<1x128xf32> to vector<8x128xf32>
    %6 = arith.addf %3, %5 : vector<8x128xf32>
    %cst_5 = arith.constant 0.000000e+00 : f32
    %7 = vector.broadcast %cst_5 : f32 to vector<8x128xf32>
    %8 = arith.maximumf %6, %7 : vector<8x128xf32>
    %9 = arith.truncf %8 : vector<8x128xf32> to vector<8x128xbf16>
    %c0_6 = arith.constant 0 : index
    %c0_7 = arith.constant 0 : index
    %10 = vector.load %arg4[%c0_6, %c0_7] : memref<128x128xbf16, #tpu.memory_space<vmem>>, vector<128x128xbf16>
    %cst_8 = arith.constant dense<0.000000e+00> : vector<8x128xf32>
    %11 = tpu.matmul %9, %10, %cst_8 {dimension_numbers = #tpu.dot_dimension_numbers<[1], [0], [0], [1], [0, 0, 1, 1], [], []>} : vector<8x128xbf16>, vector<128x128xbf16>, vector<8x128xf32> -> vector<8x128xf32>
    %c0_9 = arith.constant 0 : index
    %c0_10 = arith.constant 0 : index
    %12 = vector.load %arg5[%c0_9, %c0_10] : memref<1x128xf32, #tpu.memory_space<vmem>>, vector<1x128xf32>
    %13 = vector.broadcast %12 : vector<1x128xf32> to vector<8x128xf32>
    %14 = arith.addf %11, %13 : vector<8x128xf32>
    %15 = arith.addf %14, %0 : vector<8x128xf32>
    %cst_11 = arith.constant 0.000000e+00 : f32
    %16 = vector.broadcast %cst_11 : f32 to vector<8x128xf32>
    %17 = arith.maximumf %15, %16 : vector<8x128xf32>
    %c0_12 = arith.constant 0 : index
    %c0_13 = arith.constant 0 : index
    %18 = vector.load %arg6[%c0_12, %c0_13] : memref<8x128xf32, #tpu.memory_space<vmem>>, vector<8x128xf32>
    tpu.vector_store %arg6[%c0_12, %c0_13], %17 {strides = array<i32>} : memref<8x128xf32, #tpu.memory_space<vmem>>, vector<8x128xf32>,
    return
  }
  func.func @transform_0(%arg0: i32) -> (i32, i32) {
    %c0_i32 = arith.constant 0 : i32
    %c0_i32_0 = arith.constant 0 : i32
    return %arg0, %c0_i32 : i32, i32
  }
  func.func @transform_1(%arg0: i32) -> (i32, i32) {
    %c0_i32 = arith.constant 0 : i32
    %c0_i32_0 = arith.constant 0 : i32
    %c0_i32_1 = arith.constant 0 : i32
    return %c0_i32, %c0_i32_0 : i32, i32
  }
  func.func @transform_2(%arg0: i32) -> (i32, i32) {
    %c0_i32 = arith.constant 0 : i32
    %c0_i32_0 = arith.constant 0 : i32
    %c0_i32_1 = arith.constant 0 : i32
    return %c0_i32, %c0_i32_0 : i32, i32
  }
  func.func @transform_3(%arg0: i32) -> (i32, i32) {
    %c0_i32 = arith.constant 0 : i32
    %c0_i32_0 = arith.constant 0 : i32
    %c0_i32_1 = arith.constant 0 : i32
    return %c0_i32, %c0_i32_0 : i32, i32
  }
  func.func @transform_4(%arg0: i32) -> (i32, i32) {
    %c0_i32 = arith.constant 0 : i32
    %c0_i32_0 = arith.constant 0 : i32
    %c0_i32_1 = arith.constant 0 : i32
    return %c0_i32, %c0_i32_0 : i32, i32
  }
  func.func @transform_5(%arg0: i32) -> (i32, i32) {
    %c0_i32 = arith.constant 0 : i32
    %c0_i32_0 = arith.constant 0 : i32
    return %arg0, %c0_i32 : i32, i32
  }
}

</mosaic_0001>

<llo_original>
// kernel: tpu_custom_call.1
$region0: #{tpu_custom_call.1}
  #allocation0 [shape = 'u32[]', space=smem, size = 0x4, offset = 0x4, fixed_abs, tag = 'smem constant byte address 0x4 - core index']
  #allocation1 [shape = 'u32[144,128]{1,0:T(1,128)}', space=vmem, size = 0x12000, scoped, tag = 'internal scratch']
  %s0 = inlined_call_operand.hbm [shape: f32[8,128], index: 0, kind: input, shape index: {}]
  %s1 = inlined_call_operand.hbm [shape: bf16[128,128], index: 1, kind: input, shape index: {}]
  %s2 = inlined_call_operand.vmem [shape: f32[1,128], index: 2, kind: input, shape index: {}]
  %s3 = inlined_call_operand.hbm [shape: bf16[128,128], index: 3, kind: input, shape index: {}]
  %s4 = inlined_call_operand.vmem [shape: f32[1,128], index: 4, kind: input, shape index: {}]
  %s5 = inlined_call_operand.hbm [shape: f32[8,128], index: 5, kind: output, shape index: {}]
  %s6 = sld [smem:[#allocation0]]
  $region42: #{tpu_custom_call.1} parent=0
    _
  %s8 = ssub.s32 1, %s6
  %s9 = scalar_select 0, %s8, %s6
  $region1: #{tpu_custom_call.1} parent=0
    #allocation2 [shape = 'u8[4096]{0}', space=vmem, size = 0x1000, scoped, tag = 'input window, operand 0, single buffered']
    #allocation3 [shape = 's32[1]{0}', space=sflag, size = 0x4, scoped, tag = 'scoped memory for tpu_custom_call.1']
    #allocation4 [shape = 's32[1]{0}', space=sflag, size = 0x4, scoped, tag = 'scoped memory for tpu_custom_call.1']
    #allocation5 [shape = 'u8[32768]{0}', space=vmem, size = 0x8000, scoped, tag = 'input window, operand 1, single buffered']
    #allocation6 [shape = 's32[1]{0}', space=sflag, size = 0x4, scoped, tag = 'scoped memory for tpu_custom_call.1']
    #allocation7 [shape = 'u8[32768]{0}', space=vmem, size = 0x8000, scoped, tag = 'input window, operand 3, single buffered']
    #allocation8 [shape = 'u8[4096]{0}', space=vmem, size = 0x1000, scoped, tag = 'output window, operand 0, single buffered']
    %10 = vsyncpa [#allocation3], 0
    %11 = vsyncpa [#allocation6], 0
    %12 = vsyncpa [#allocation4], 0
    // Predicated region
    $region2: #{tpu_custom_call.1} parent=1 // pred_check
      _
    $region3: #{tpu_custom_call.1} parent=1 // pred_check_branch
      %14 = sbr.rel (0) target = $region5
    $region4: #{tpu_custom_call.1} parent=1 // pred_region
      %s16 = ssub.s32 128, 128
      %17 = vsyncadd [#allocation3], %s16
      %s19 = sshll.u32 [#allocation2], 4
      %s20 = int_to_ptr.vmem [resolvable:$true] %s19
      %22 = dma.hbm_to_vmem [thread:$0]  %s0, 128, %s20, [#allocation3]
    $region5: #{tpu_custom_call.1} parent=1 // pred_fallthru
      _
    // Predicated region
    $region6: #{tpu_custom_call.1} parent=1 // pred_check
      _
    $region7: #{tpu_custom_call.1} parent=1 // pred_check_branch
      %24 = sbr.rel (0) target = $region9
    $region8: #{tpu_custom_call.1} parent=1 // pred_region
      %s26 = ssub.s32 1024, 1024
      %27 = vsyncadd [#allocation6], %s26
      %s28 = sshll.u32 [#allocation5], 4
      %s29 = int_to_ptr.vmem [resolvable:$true] %s28
      %34 = dma.hbm_to_vmem [thread:$0]  %s1, 1024, %s29, [#allocation6], 64, 64, 4
    $region9: #{tpu_custom_call.1} parent=1 // pred_fallthru
      _
    // Predicated region
    $region10: #{tpu_custom_call.1} parent=1 // pred_check
      _
    $region11: #{tpu_custom_call.1} parent=1 // pred_check_branch
      %36 = sbr.rel (0) target = $region13
    $region12: #{tpu_custom_call.1} parent=1 // pred_region
      _
    $region13: #{tpu_custom_call.1} parent=1 // pred_fallthru
      _
    // Predicated region
    $region14: #{tpu_custom_call.1} parent=1 // pred_check
      _
    $region15: #{tpu_custom_call.1} parent=1 // pred_check_branch
      %38 = sbr.rel (0) target = $region17
    $region16: #{tpu_custom_call.1} parent=1 // pred_region
      %s40 = ssub.s32 1024, 1024
      %41 = vsyncadd [#allocation6], %s40
      %s42 = sshll.u32 [#allocation7], 4
      %s43 = int_to_ptr.vmem [resolvable:$true] %s42
      %48 = dma.hbm_to_vmem [thread:$0]  %s3, 1024, %s43, [#allocation6], 64, 64, 4
    $region17: #{tpu_custom_call.1} parent=1 // pred_fallthru
      _
    // Predicated region
    $region18: #{tpu_custom_call.1} parent=1 // pred_check
      _
    $region19: #{tpu_custom_call.1} parent=1 // pred_check_branch
      %50 = sbr.rel (0) target = $region21
    $region20: #{tpu_custom_call.1} parent=1 // pred_region
      _
    $region21: #{tpu_custom_call.1} parent=1 // pred_fallthru
      _
    // Predicated region
    $region22: #{tpu_custom_call.1} parent=1 // pred_check
      _
    $region23: #{tpu_custom_call.1} parent=1 // pred_check_branch
      %52 = sbr.rel (0) target = $region25
    $region24: #{tpu_custom_call.1} parent=1 // pred_region
      %53 = dma.done [#allocation3], 128
    $region25: #{tpu_custom_call.1} parent=1 // pred_fallthru
      _
    // Predicated region
    $region26: #{tpu_custom_call.1} parent=1 // pred_check
      _
    $region27: #{tpu_custom_call.1} parent=1 // pred_check_branch
      %55 = sbr.rel (0) target = $region29
    $region28: #{tpu_custom_call.1} parent=1 // pred_region
      %56 = dma.done [#allocation6], 1024
    $region29: #{tpu_custom_call.1} parent=1 // pred_fallthru
      _
    // Predicated region
    $region30: #{tpu_custom_call.1} parent=1 // pred_check
      _
    $region31: #{tpu_custom_call.1} parent=1 // pred_check_branch
      %58 = sbr.rel (0) target = $region33
    $region32: #{tpu_custom_call.1} parent=1 // pred_region
      %59 = dma.done [#allocation6], 1024
    $region33: #{tpu_custom_call.1} parent=1 // pred_fallthru
      _
    %v61 = vld [vmem:[#allocation2] sm:$0xff]
    %v62 = vpack.c.bf16 %v61, %v61
    %v63 = vld [vmem:[#allocation5] sm:$0xf]
    %v64 = vld [vmem:[#allocation5 + $0x4] sm:$0xf]
    %v65 = vld [vmem:[#allocation5 + $0x8] sm:$0xf]
    %v66 = vld [vmem:[#allocation5 + $0xc] sm:$0xf]
    %v67 = vld [vmem:[#allocation5 + $0x10] sm:$0xf]
    %v68 = vld [vmem:[#allocation5 + $0x14] sm:$0xf]
    %v69 = vld [vmem:[#allocation5 + $0x18] sm:$0xf]
    %v70 = vld [vmem:[#allocation5 + $0x1c] sm:$0xf]
    %v71 = vld [vmem:[#allocation5 + $0x20] sm:$0xf]
    %v72 = vld [vmem:[#allocation5 + $0x24] sm:$0xf]
    %v73 = vld [vmem:[#allocation5 + $0x28] sm:$0xf]
    %v74 = vld [vmem:[#allocation5 + $0x2c] sm:$0xf]
    %v75 = vld [vmem:[#allocation5 + $0x30] sm:$0xf]
    %v76 = vld [vmem:[#allocation5 + $0x34] sm:$0xf]
    %v77 = vld [vmem:[#allocation5 + $0x38] sm:$0xf]
    %v78 = vld [vmem:[#allocation5 + $0x3c] sm:$0xf]
    %v79 = vld [vmem:[%s2] sm:$0x1]
    %v81 = vlaneseq
    %v82 = vshrl.u32 %v81, 7
    %v83 = vsub.s32 0, %v82
    %v84 = vrot.slane %v79, %v83
    %v102 = vunpack.c.l.b16 %v63
    %v103 = vunpack.c.l.b16 %v64
    %v104 = vunpack.c.l.b16 %v65
    %v105 = vunpack.c.l.b16 %v66
    %v106 = vunpack.c.l.b16 %v67
    %v107 = vunpack.c.l.b16 %v68
    %v108 = vunpack.c.l.b16 %v69
    %v109 = vunpack.c.l.b16 %v70
    %v110 = vunpack.c.l.b16 %v71
    %v111 = vunpack.c.l.b16 %v72
    %v112 = vunpack.c.l.b16 %v73
    %v113 = vunpack.c.l.b16 %v74
    %v114 = vunpack.c.l.b16 %v75
    %v115 = vunpack.c.l.b16 %v76
    %v116 = vunpack.c.l.b16 %v77
    %v117 = vunpack.c.l.b16 %v78
    %v118 = vpack.c.b16 %v103, %v102
    %v119 = vpack.c.b16 %v105, %v104
    %v120 = vpack.c.b16 %v107, %v106
    %v121 = vpack.c.b16 %v109, %v108
    %v122 = vpack.c.b16 %v111, %v110
    %v123 = vpack.c.b16 %v113, %v112
    %v124 = vpack.c.b16 %v115, %v114
    %v125 = vpack.c.b16 %v117, %v116
    %134 = vmatprep.subr.bf16.mxu0 0
    %135 = vmatpush1.bf16.msra.mxu0 %v125
    %136 = vmatprep.subr.bf16.mxu0 0
    %137 = vmatpush1.bf16.msra.mxu0 %v124
    %138 = vmatprep.subr.bf16.mxu0 0
    %139 = vmatpush1.bf16.msra.mxu0 %v123
    %140 = vmatprep.subr.bf16.mxu0 0
    %141 = vmatpush1.bf16.msra.mxu0 %v122
    %142 = vmatprep.subr.bf16.mxu0 0
    %143 = vmatpush1.bf16.msra.mxu0 %v121
    %144 = vmatprep.subr.bf16.mxu0 0
    %145 = vmatpush1.bf16.msra.mxu0 %v120
    %146 = vmatprep.subr.bf16.mxu0 0
    %147 = vmatpush1.bf16.msra.mxu0 %v119
    %148 = vmatprep.subr.bf16.mxu0 0
    %149 = vmatpush1.bf16.msra.mxu0 %v118
    %150 = vmatprep.subr.bf16.mxu0 0
    %151 = vmatpush2.bf16.msra.mxu0 0
    %152 = vmatprep.subr.bf16.mxu0 0
    %153 = vmatpush2.bf16.msra.mxu0 0
    %154 = vmatprep.subr.bf16.mxu0 0
    %155 = vmatpush2.bf16.msra.mxu0 0
    %156 = vmatprep.subr.bf16.mxu0 0
    %157 = vmatpush2.bf16.msra.mxu0 0
    %158 = vmatprep.subr.bf16.mxu0 0
    %159 = vmatpush2.bf16.msra.mxu0 0
    %160 = vmatprep.subr.bf16.mxu0 0
    %161 = vmatpush2.bf16.msra.mxu0 0
    %162 = vmatprep.subr.bf16.mxu0 0
    %163 = vmatpush2.bf16.msra.mxu0 0
    %164 = vmatprep.subr.bf16.mxu0 0
    %165 = vmatpush2.bf16.msra.mxu0 0
    %166 = vmatprep.mubr.bf16.mxu0 0
    %167 = vmatmul.mubr.bf16.gmra.mxu0 %v62
    %v168 = vpop.f32.mrf.mxu0
    %v169 = vadd.f32 %v84, %v168
    %v170 = vpop.f32.mrf.mxu0
    %v171 = vpop.f32.mrf.mxu0
    %v172 = vpop.f32.mrf.mxu0
    %173 = vdwg.mxu0
    %v174 = vmax.f32 %v169, 0.0
    %v175 = vpack.c.bf16 %v174, %v174
    %v176 = vld [vmem:[#allocation7] sm:$0xf]
    %v177 = vld [vmem:[#allocation7 + $0x4] sm:$0xf]
    %v178 = vld [vmem:[#allocation7 + $0x8] sm:$0xf]
    %v179 = vld [vmem:[#allocation7 + $0xc] sm:$0xf]
    %v180 = vld [vmem:[#allocation7 + $0x10] sm:$0xf]
    %v181 = vld [vmem:[#allocation7 + $0x14] sm:$0xf]
    %v182 = vld [vmem:[#allocation7 + $0x18] sm:$0xf]
    %v183 = vld [vmem:[#allocation7 + $0x1c] sm:$0xf]
    %v184 = vld [vmem:[#allocation7 + $0x20] sm:$0xf]
    %v185 = vld [vmem:[#allocation7 + $0x24] sm:$0xf]
    %v186 = vld [vmem:[#allocation7 + $0x28] sm:$0xf]
    %v187 = vld [vmem:[#allocation7 + $0x2c] sm:$0xf]
    %v188 = vld [vmem:[#allocation7 + $0x30] sm:$0xf]
    %v189 = vld [vmem:[#allocation7 + $0x34] sm:$0xf]
    %v190 = vld [vmem:[#allocation7 + $0x38] sm:$0xf]
    %v191 = vld [vmem:[#allocation7 + $0x3c] sm:$0xf]
    %v192 = vld [vmem:[%s4] sm:$0x1]
    %v194 = vlaneseq
    %v195 = vshrl.u32 %v194, 7
    %v196 = vsub.s32 0, %v195
    %v197 = vrot.slane %v192, %v196
    %v215 = vunpack.c.l.b16 %v176
    %v216 = vunpack.c.l.b16 %v177
    %v217 = vunpack.c.l.b16 %v178
    %v218 = vunpack.c.l.b16 %v179
    %v219 = vunpack.c.l.b16 %v180
    %v220 = vunpack.c.l.b16 %v181
    %v221 = vunpack.c.l.b16 %v182
    %v222 = vunpack.c.l.b16 %v183
    %v223 = vunpack.c.l.b16 %v184
    %v224 = vunpack.c.l.b16 %v185
    %v225 = vunpack.c.l.b16 %v186
    %v226 = vunpack.c.l.b16 %v187
    %v227 = vunpack.c.l.b16 %v188
    %v228 = vunpack.c.l.b16 %v189
    %v229 = vunpack.c.l.b16 %v190
    %v230 = vunpack.c.l.b16 %v191
    %v231 = vpack.c.b16 %v216, %v215
    %v232 = vpack.c.b16 %v218, %v217
    %v233 = vpack.c.b16 %v220, %v219
    %v234 = vpack.c.b16 %v222, %v221
    %v235 = vpack.c.b16 %v224, %v223
    %v236 = vpack.c.b16 %v226, %v225
    %v237 = vpack.c.b16 %v228, %v227
    %v238 = vpack.c.b16 %v230, %v229
    %247 = vmatprep.subr.bf16.mxu0 0
    %248 = vmatpush1.bf16.msra.mxu0 %v238
    %249 = vmatprep.subr.bf16.mxu0 0
    %250 = vmatpush1.bf16.msra.mxu0 %v237
    %251 = vmatprep.subr.bf16.mxu0 0
    %252 = vmatpush1.bf16.msra.mxu0 %v236
    %253 = vmatprep.subr.bf16.mxu0 0
    %254 = vmatpush1.bf16.msra.mxu0 %v235
    %255 = vmatprep.subr.bf16.mxu0 0
    %256 = vmatpush1.bf16.msra.mxu0 %v234
    %257 = vmatprep.subr.bf16.mxu0 0
    %258 = vmatpush1.bf16.msra.mxu0 %v233
    %259 = vmatprep.subr.bf16.mxu0 0
    %260 = vmatpush1.bf16.msra.mxu0 %v232
    %261 = vmatprep.subr.bf16.mxu0 0
    %262 = vmatpush1.bf16.msra.mxu0 %v231
    %263 = vmatprep.subr.bf16.mxu0 0
    %264 = vmatpush2.bf16.msra.mxu0 0
    %265 = vmatprep.subr.bf16.mxu0 0
    %266 = vmatpush2.bf16.msra.mxu0 0
    %267 = vmatprep.subr.bf16.mxu0 0
    %268 = vmatpush2.bf16.msra.mxu0 0
    %269 = vmatprep.subr.bf16.mxu0 0
    %270 = vmatpush2.bf16.msra.mxu0 0
    %271 = vmatprep.subr.bf16.mxu0 0
    %272 = vmatpush2.bf16.msra.mxu0 0
    %273 = vmatprep.subr.bf16.mxu0 0
    %274 = vmatpush2.bf16.msra.mxu0 0
    %275 = vmatprep.subr.bf16.mxu0 0
    %276 = vmatpush2.bf16.msra.mxu0 0
    %277 = vmatprep.subr.bf16.mxu0 0
    %278 = vmatpush2.bf16.msra.mxu0 0
    %279 = vmatprep.mubr.bf16.mxu0 0
    %280 = vmatmul.mubr.bf16.gmra.mxu0 %v175
    %v281 = vpop.f32.mrf.mxu0
    %v282 = vadd.f32 %v197, %v281
    %v283 = vpop.f32.mrf.mxu0
    %v284 = vpop.f32.mrf.mxu0
    %v285 = vpop.f32.mrf.mxu0
    %286 = vdwg.mxu0
    %v287 = vadd.f32 %v282, %v61
    %v288 = vmax.f32 %v287, 0.0
    %289 = vst [vmem:[#allocation8] sm:$0xff] %v288
    // Predicated region
    $region34: #{tpu_custom_call.1} parent=1 // pred_check
      _
    $region35: #{tpu_custom_call.1} parent=1 // pred_check_branch
      %291 = sbr.rel (0) target = $region37
    $region36: #{tpu_custom_call.1} parent=1 // pred_region
      %s293 = ssub.s32 128, 128
      %294 = vsyncadd [#allocation4], %s293
      %s296 = sshll.u32 [#allocation8], 4
      %s297 = int_to_ptr.vmem [resolvable:$true] %s296
      %299 = dma.vmem_to_hbm [thread:$0]  %s297, 128, %s5, [#allocation4]
    $region37: #{tpu_custom_call.1} parent=1 // pred_fallthru
      _
    // Predicated region
    $region38: #{tpu_custom_call.1} parent=1 // pred_check
      _
    $region39: #{tpu_custom_call.1} parent=1 // pred_check_branch
      %301 = sbr.rel (0) target = $region41
    $region40: #{tpu_custom_call.1} parent=1 // pred_region
      %302 = dma.done [#allocation4], 128
    $region41: #{tpu_custom_call.1} parent=1 // pred_fallthru
      _
    %303 = vsyncpa [#allocation3], 1
    %304 = vsyncpa [#allocation6], 1
    %305 = vsyncpa [#allocation4], 1

</llo_original>
